<compile_context>
chip_gen: v7x
topology: tpu7x:2x2x1
jax: 0.10.0
libtpu: 0.0.40
codegen_flags: <defaults>
</compile_context>

<pallas_src>
import math

import jax
import jax.numpy as jnp
from jax.experimental import pallas as pl
from jax.experimental.pallas import tpu as pltpu


def _make_self_attn_kernel(scale, residual, dk, do, mm_dtype):
    def kernel(x_ref, w_ref, o_ref):
        xb = x_ref[...]                                   # (TB, E, Din), input dtype
        tb, e, din = xb.shape
        w = w_ref[...]                                    # (Din, 2*Dk + Do)

        # ---- fused Q/K/V projection: one 2-D MXU matmul --------------------
        x2d = xb.reshape(tb * e, din)
        qkv = jnp.dot(x2d.astype(mm_dtype), w.astype(mm_dtype),
                      preferred_element_type=jnp.float32)  # (TB*E, 2Dk+Do), f32 acc
        qkv = qkv.reshape(tb, e, 2 * dk + do)
        q = qkv[:, :, :dk] * scale          # fold 1/sqrt(Dk) into Q (E*Dk muls, not E*E)
        k = qkv[:, :, dk:2 * dk]
        v = qkv[:, :, 2 * dk:]

        # ---- scaled dot-product scores, f32 softmax statistics -------------
        scores = jnp.einsum('bxj,byj->bxy',
                            q.astype(mm_dtype), k.astype(mm_dtype),
                            preferred_element_type=jnp.float32)   # (TB, E, E)
        m = jnp.max(scores, axis=-1, keepdims=True)
        p = jnp.exp(scores - m)
        denom = jnp.sum(p, axis=-1, keepdims=True)

        # ---- PV matmul with deferred normalization --------------------------
        out = jnp.einsum('bxy,byj->bxj',
                         p.astype(mm_dtype), v.astype(mm_dtype),
                         preferred_element_type=jnp.float32)      # (TB, E, Do)
        r = pl.reciprocal(denom, approx=True)   # EUP slot (nearly free)
        r = r * (2.0 - denom * r)               # one Newton step -> ~f32-accurate
        out = out * r

        if residual:
            out = out + xb.astype(jnp.float32)

        # Single full, unmasked block store.
        o_ref[...] = out.astype(o_ref.dtype)

    return kernel


def _vmem_budget_bytes():
    """Per-generation VMEM budget: physical capacity minus ~25% headroom."""
    try:
        info = pltpu.get_tpu_info()
        phys = int(getattr(info, "vmem_capacity_bytes", 64 << 20))
    except Exception:
        phys = 64 << 20          # conservative (v7x) fallback
    return (phys * 3) // 4       # 96 MiB on v5e/v6e, 48 MiB on v7x


def _block_footprint_bytes(bb, E, Din, Dk, Do, itemsize):
    """VMEM footprint estimate for one grid step, incl. intermediates."""
    dcat = 2 * Dk + Do
    f32 = 4
    io = 2 * bb * E * (Din + Do) * itemsize      # double-buffered x / out blocks
    w = 2 * Din * dcat * itemsize                # double-buffered fused weight
    inter = bb * E * dcat * f32                  # q, k, v (f32 accumulators)
    inter += 2 * bb * E * E * f32                # scores + exp(p)
    inter += bb * E * (Do + 4) * f32             # f32 out + max/denom/recip
    return io + w + inter


def self_attn_pallas(x, wq, wk, wv, *, residual=False, block_b=None):
    """Fused self-attention forward matching self_attn.forward on [B, E, D]."""
    B, E, Din = x.shape
    Dk = wq.shape[1]
    Do = wv.shape[1]
    assert wq.shape == (Din, Dk) and wk.shape == (Din, Dk) and wv.shape == (Din, Do)
    if residual:
        assert Do == Din, "residual requires out_dim == in_dim"

    xd = jnp.dtype(x.dtype)
    # bf16 inputs go straight to the MXU; everything else computes in f32.
    mm_dtype = jnp.bfloat16 if xd == jnp.bfloat16 else jnp.float32
    itemsize = xd.itemsize

    budget = _vmem_budget_bytes()
    if block_b is None:
        # Largest divisor of B whose footprint fits the budget.  Keep >= 2 grid
        # steps when B >= 2 so v7x's second TensorCore gets work ("parallel"
        # axis); the extra grid step is ~0.35 us on single-core chips.
        max_bb = B // 2 if B >= 2 else B
        block_b = 1
        for bb in range(1, max_bb + 1):
            if B % bb == 0 and _block_footprint_bytes(bb, E, Din, Dk, Do, itemsize) <= budget:
                block_b = bb
    assert B % block_b == 0, "block_b must divide B (no padded HBM copy of x)"
    grid = (B // block_b,)

    footprint = _block_footprint_bytes(block_b, E, Din, Dk, Do, itemsize)
    vmem_limit = int(min(budget, max(footprint + footprint // 4, 32 << 20)))

    # Fused projection weight [Wq | Wk | Wv]: one weight DMA, one matmul.
    w_cat = jnp.concatenate([wq, wk, wv], axis=1)        # (Din, 2*Dk + Do)

    scale = 1.0 / math.sqrt(float(Dk))
    kernel = _make_self_attn_kernel(scale, residual, Dk, Do, mm_dtype)

    return pl.pallas_call(
        kernel,
        out_shape=jax.ShapeDtypeStruct((B, E, Do), x.dtype),
        grid_spec=pltpu.PrefetchScalarGridSpec(
            num_scalar_prefetch=0,
            grid=grid,
            in_specs=[
                pl.BlockSpec((block_b, E, Din), lambda b: (b, 0, 0)),
                # Constant index_map -> fused weight stays VMEM-resident.
                pl.BlockSpec((Din, 2 * Dk + Do), lambda b: (0, 0)),
            ],
            out_specs=pl.BlockSpec((block_b, E, Do), lambda b: (b, 0, 0)),
        ),
        compiler_params=pltpu.CompilerParams(
            dimension_semantics=("parallel",),
            vmem_limit_bytes=vmem_limit,
        ),
    )(x, w_cat)


def self_attn_ref(x, wq, wk, wv, *, residual=False):
    """Pure-JAX reference mirroring the PyTorch module."""
    q = jnp.einsum('bei,ij->bej', x, wq)
    k = jnp.einsum('bei,ij->bej', x, wk)
    v = jnp.einsum('bei,ij->bej', x, wv)
    scores = jnp.einsum('bxj,byj->bxy', q, k) / math.sqrt(float(k.shape[-1]))
    weights = jax.nn.softmax(scores, axis=2)
    out = jnp.einsum('bxy,byj->bxj', weights, v)
    if residual:
        out = out + x
    return out


if __name__ == "__main__":
    B, E = 2, 8           # batch, sequence ("elements")
    in_dim, key_dim, out_dim = 32, 32, 32

    key = jax.random.PRNGKey(0)
    kx, kq, kk, kv = jax.random.split(key, 4)

    x = jax.random.normal(kx, (B, E, in_dim), dtype=jnp.float32)
    # Uniform(-1/sqrt(dim), 1/sqrt(dim)) like reset_parameters().
    q_stdv = 1.0 / math.sqrt(key_dim)
    v_stdv = 1.0 / math.sqrt(out_dim)
    wq = jax.random.uniform(kq, (in_dim, key_dim), jnp.float32, -q_stdv, q_stdv)
    wk = jax.random.uniform(kk, (in_dim, key_dim), jnp.float32, -q_stdv, q_stdv)
    wv = jax.random.uniform(kv, (in_dim, out_dim), jnp.float32, -v_stdv, v_stdv)

    for residual in (False, True):
        out = jax.block_until_ready(self_attn_pallas(x, wq, wk, wv, residual=residual))
        ref = self_attn_ref(x, wq, wk, wv, residual=residual)
        assert out.shape == ref.shape, (out.shape, ref.shape)
        # Newton-refined approx reciprocal is ~f32-accurate but not bit-exact;
        # 1e-4 still validates the math tightly.
        assert jnp.allclose(out, ref, atol=1e-4, rtol=1e-4), \
            f"mismatch vs reference (residual={residual})"

    print("KERNEL_OK")
</pallas_src>

<mosaic_0001>
module attributes {stable_mosaic.version = 11 : i64} {
  func.func @kernel(%arg0: i32, %arg1: memref<1x8x32xf32, #tpu.memory_space<vmem>>, %arg2: memref<32x96xf32, #tpu.memory_space<vmem>>, %arg3: memref<1x8x32xf32, #tpu.memory_space<vmem>>) attributes {dimension_semantics = [#tpu.dimension_semantics<parallel>], iteration_bounds = array<i64: 2>, scalar_prefetch = 0 : i64, scratch_operands = 0 : i64, tpu.core_type = #tpu.core_type<tc>, window_params = [{transform_indices = @transform_0, window_bounds = array<i64: 1, 8, 32>}, {pipeline_mode = #tpu.pipeline_mode<synchronous>, transform_indices = @transform_1, window_bounds = array<i64: 32, 96>}, {transform_indices = @transform_2, window_bounds = array<i64: 1, 8, 32>}]} {
    %c0 = arith.constant 0 : index
    %c0_0 = arith.constant 0 : index
    %c0_1 = arith.constant 0 : index
    %0 = vector.load %arg1[%c0, %c0_0, %c0_1] : memref<1x8x32xf32, #tpu.memory_space<vmem>>, vector<1x8x32xf32>
    %c0_2 = arith.constant 0 : index
    %c0_3 = arith.constant 0 : index
    %1 = vector.load %arg2[%c0_2, %c0_3] : memref<32x96xf32, #tpu.memory_space<vmem>>, vector<32x96xf32>
    %2 = vector.shape_cast %0 : vector<1x8x32xf32> to vector<8x32xf32>
    %cst = arith.constant dense<0.000000e+00> : vector<8x96xf32>
    %3 = tpu.matmul %2, %1, %cst {dimension_numbers = #tpu.dot_dimension_numbers<[1], [0], [0], [1], [0, 0, 1, 1], [], []>} : vector<8x32xf32>, vector<32x96xf32>, vector<8x96xf32> -> vector<8x96xf32>
    %4 = vector.shape_cast %3 : vector<8x96xf32> to vector<1x8x96xf32>
    %5 = vector.extract_strided_slice %4 {offsets = [0, 0, 0], sizes = [1, 8, 32], strides = [1, 1, 1]} : vector<1x8x96xf32> to vector<1x8x32xf32>
    %cst_4 = arith.constant 0.176776692 : f32
    %6 = vector.broadcast %cst_4 : f32 to vector<1x8x32xf32>
    %7 = arith.mulf %5, %6 : vector<1x8x32xf32>
    %8 = vector.extract_strided_slice %4 {offsets = [0, 0, 32], sizes = [1, 8, 32], strides = [1, 1, 1]} : vector<1x8x96xf32> to vector<1x8x32xf32>
    %9 = vector.extract_strided_slice %4 {offsets = [0, 0, 64], sizes = [1, 8, 32], strides = [1, 1, 1]} : vector<1x8x96xf32> to vector<1x8x32xf32>
    "tpu.trace_start"() <{level = 10 : i32, message = "bxj,byj->bxy"}> : () -> ()
    %cst_5 = arith.constant dense<0.000000e+00> : vector<1x8x8xf32>
    %10 = tpu.matmul %7, %8, %cst_5 {dimension_numbers = #tpu.dot_dimension_numbers<[2], [2], [1], [1], [0, 0, 0, 1, 1, 1], [0], [0]>} : vector<1x8x32xf32>, vector<1x8x32xf32>, vector<1x8x8xf32> -> vector<1x8x8xf32>
    "tpu.trace_stop"() : () -> ()
    %cst_6 = arith.constant dense<0xFF800000> : vector<1x8xf32>
    %11 = vector.multi_reduction <maximumf>, %10, %cst_6 [2] : vector<1x8x8xf32> to vector<1x8xf32>
    %12 = vector.shape_cast %11 : vector<1x8xf32> to vector<1x8x1xf32>
    %13 = vector.broadcast %12 : vector<1x8x1xf32> to vector<1x8x8xf32>
    %14 = arith.subf %10, %13 : vector<1x8x8xf32>
    %15 = math.exp %14 : vector<1x8x8xf32>
    %cst_7 = arith.constant dense<0.000000e+00> : vector<1x8xf32>
    %16 = vector.multi_reduction <add>, %15, %cst_7 [2] : vector<1x8x8xf32> to vector<1x8xf32>
    %17 = vector.shape_cast %16 : vector<1x8xf32> to vector<1x8x1xf32>
    "tpu.trace_start"() <{level = 10 : i32, message = "bxy,byj->bxj"}> : () -> ()
    %cst_8 = arith.constant dense<0.000000e+00> : vector<1x8x32xf32>
    %18 = tpu.matmul %15, %9, %cst_8 {dimension_numbers = #tpu.dot_dimension_numbers<[2], [1], [1], [2], [0, 0, 0, 1, 1, 2], [0], [0]>} : vector<1x8x8xf32>, vector<1x8x32xf32>, vector<1x8x32xf32> -> vector<1x8x32xf32>
    "tpu.trace_stop"() : () -> ()
    %19 = tpu.reciprocal %17 {approx = true} : vector<1x8x1xf32> -> vector<1x8x1xf32>
    %20 = arith.mulf %17, %19 : vector<1x8x1xf32>
    %cst_9 = arith.constant 2.000000e+00 : f32
    %21 = vector.broadcast %cst_9 : f32 to vector<1x8x1xf32>
    %22 = arith.subf %21, %20 : vector<1x8x1xf32>
    %23 = arith.mulf %19, %22 : vector<1x8x1xf32>
    %24 = vector.broadcast %23 : vector<1x8x1xf32> to vector<1x8x32xf32>
    %25 = arith.mulf %18, %24 : vector<1x8x32xf32>
    %c0_10 = arith.constant 0 : index
    %c0_11 = arith.constant 0 : index
    %c0_12 = arith.constant 0 : index
    %26 = vector.load %arg3[%c0_10, %c0_11, %c0_12] : memref<1x8x32xf32, #tpu.memory_space<vmem>>, vector<1x8x32xf32>
    tpu.vector_store %arg3[%c0_10, %c0_11, %c0_12], %25 {strides = array<i32>} : memref<1x8x32xf32, #tpu.memory_space<vmem>>, vector<1x8x32xf32>,
    return
  }
  func.func @transform_0(%arg0: i32) -> (i32, i32, i32) {
    %c0_i32 = arith.constant 0 : i32
    %c0_i32_0 = arith.constant 0 : i32
    %c0_i32_1 = arith.constant 0 : i32
    return %arg0, %c0_i32, %c0_i32_0 : i32, i32, i32
  }
  func.func @transform_1(%arg0: i32) -> (i32, i32) {
    %c0_i32 = arith.constant 0 : i32
    %c0_i32_0 = arith.constant 0 : i32
    %c0_i32_1 = arith.constant 0 : i32
    return %c0_i32, %c0_i32_0 : i32, i32
  }
  func.func @transform_2(%arg0: i32) -> (i32, i32, i32) {
    %c0_i32 = arith.constant 0 : i32
    %c0_i32_0 = arith.constant 0 : i32
    %c0_i32_1 = arith.constant 0 : i32
    return %arg0, %c0_i32, %c0_i32_0 : i32, i32, i32
  }
}

</mosaic_0001>

<llo_original>
// kernel: tpu_custom_call.1
$region0: #{tpu_custom_call.1}
  #allocation0 [shape = 'u32[]', space=smem, size = 0x4, offset = 0x4, fixed_abs, tag = 'smem constant byte address 0x4 - core index']
  #allocation1 [shape = 'u32[144,128]{1,0:T(1,128)}', space=vmem, size = 0x12000, scoped, tag = 'internal scratch']
  %s0 = inlined_call_operand.hbm [shape: f32[2,8,32], index: 0, kind: input, shape index: {}]
  %s1 = inlined_call_operand.hbm [shape: f32[32,96], index: 1, kind: input, shape index: {}]
  %s2 = inlined_call_operand.hbm [shape: f32[2,8,32], index: 2, kind: output, shape index: {}]
  %s3 = sld [smem:[#allocation0]]
  $region49: #{tpu_custom_call.1} parent=0
    _
  %s5 = ssub.s32 1, %s3
  %s6 = scalar_select 0, %s5, %s3
  $region1: #{tpu_custom_call.1} parent=0
    #allocation2 [shape = 'u8[8192]{0}', space=vmem, size = 0x2000, scoped, tag = 'input window, operand 0']
    #allocation3 [shape = 's32[2]{0}', space=sflag, size = 0x8, scoped, tag = 'scoped memory for tpu_custom_call.1']
    #allocation4 [shape = 's32[2]{0}', space=sflag, size = 0x8, scoped, tag = 'scoped memory for tpu_custom_call.1']
    #allocation5 [shape = 'u8[16384]{0}', space=vmem, size = 0x4000, scoped, tag = 'input window, operand 1, single buffered']
    #allocation6 [shape = 's32[1]{0}', space=sflag, size = 0x4, scoped, tag = 'scoped memory for tpu_custom_call.1']
    #allocation7 [shape = 'u8[8192]{0}', space=vmem, size = 0x2000, scoped, tag = 'output window, operand 0']
    %7 = vsyncpa [#allocation3], 0
    %s8 = scalar_lea.sflag [#allocation3], 1
    %9 = vsyncpa %s8, 0
    %10 = vsyncpa [#allocation6], 0
    %11 = vsyncpa [#allocation4], 0
    %s12 = scalar_lea.sflag [#allocation4], 1
    %13 = vsyncpa %s12, 0
    loop: start=0, step=1, limit=4
    $region2: #{tpu_custom_call.1} parent=1 // loop_pre_header
      _
    $region3: #{tpu_custom_call.1} parent=1 // loop_header
      %s15 = sphi 0, %s19
      %p16 = scmp.ge.s32.totalorder %s15, 4
      %s25 = sphi 0, %s27
      %s28 = sphi 0, %s25
      %s29 = sphi 0, %s28
      %s45 = sphi 0, %s29
      %s49 = sphi 0, %s49
      %s51 = sphi 0, %s49
      %s52 = sphi 0, %s51
      %s66 = sphi 0, %s52
      %s72 = sphi 0, %s74
      %s75 = sphi 0, %s72
      %s76 = sphi 0, %s75
      %s92 = sphi 0, %s76
    $region4: #{tpu_custom_call.1} parent=1 // loop_header_branch
      %18 = sbr.rel (%p16) target = $region8
    $region5: #{tpu_custom_call.1} parent=1 // loop_body
      %s20 = ssub.s32 %s15, 1
      %s21 = ssub.s32 %s15, 2
      %s22 = sadd.s32 %s15, 1
      %s23 = ssub.s32 %s15, %s22
      %p24 = scmp.eq.s32.totalorder %s23, 0
      %s26 = sadd.s32 %s25, 1
      %s27 = scalar_select %p24, %s25, %s26
      %p30 = pneg %p24
      %p31 = scmp.eq.s32.totalorder %s15, 1
      %p32 = por %p30, %p31
      %p33 = scmp.ne.s32.totalorder %s25, %s28
      %p34 = scmp.eq.s32.totalorder %s15, 0
      %p35 = por %p33, %p34
      %p36 = scmp.ne.s32.totalorder %s25, %s28
      %p37 = scmp.eq.s32.totalorder %s20, 1
      %p38 = por %p36, %p37
      %p39 = scmp.ne.s32.totalorder %s28, %s29
      %p40 = scmp.eq.s32.totalorder %s20, 0
      %p41 = por %p39, %p40
      %p42 = scmp.ne.s32.totalorder %s28, %s29
      %p43 = scmp.eq.s32.totalorder %s21, 1
      %p44 = por %p42, %p43
      %p46 = scmp.ne.s32.totalorder %s29, %s45
      %p47 = scmp.eq.s32.totalorder %s21, 0
      %p48 = por %p46, %p47
      %s50 = sadd.s32 %s49, 1
      %p53 = scmp.eq.s32.totalorder %s15, 1
      %p54 = scmp.ne.s32.totalorder %s49, %s51
      %p55 = scmp.eq.s32.totalorder %s15, 0
      %p56 = por %p54, %p55
      %p57 = scmp.ne.s32.totalorder %s49, %s51
      %p58 = scmp.eq.s32.totalorder %s20, 1
      %p59 = por %p57, %p58
      %p60 = scmp.ne.s32.totalorder %s51, %s52
      %p61 = scmp.eq.s32.totalorder %s20, 0
      %p62 = por %p60, %p61
      %p63 = scmp.ne.s32.totalorder %s51, %s52
      %p64 = scmp.eq.s32.totalorder %s21, 1
      %p65 = por %p63, %p64
      %p67 = scmp.ne.s32.totalorder %s52, %s66
      %p68 = scmp.eq.s32.totalorder %s21, 0
      %p69 = por %p67, %p68
      %s70 = ssub.s32 %s15, %s22
      %p71 = scmp.eq.s32.totalorder %s70, 0
      %s73 = sadd.s32 %s72, 1
      %s74 = scalar_select %p71, %s72, %s73
      %p77 = pneg %p71
      %p78 = scmp.eq.s32.totalorder %s15, 1
      %p79 = por %p77, %p78
      %p80 = scmp.ne.s32.totalorder %s72, %s75
      %p81 = scmp.eq.s32.totalorder %s15, 0
      %p82 = por %p80, %p81
      %p83 = scmp.ne.s32.totalorder %s72, %s75
      %p84 = scmp.eq.s32.totalorder %s20, 1
      %p85 = por %p83, %p84
      %p86 = scmp.ne.s32.totalorder %s75, %s76
      %p87 = scmp.eq.s32.totalorder %s20, 0
      %p88 = por %p86, %p87
      %p89 = scmp.ne.s32.totalorder %s75, %s76
      %p90 = scmp.eq.s32.totalorder %s21, 1
      %p91 = por %p89, %p90
      %p93 = scmp.ne.s32.totalorder %s76, %s92
      %p94 = scmp.eq.s32.totalorder %s21, 0
      %p95 = por %p93, %p94
      %p96 = scmp.le.s32.totalorder 1, %s15
      %p97 = scmp.lt.s32.totalorder %s15, 3
      %p98 = pnand %p96, %p97
      %p99 = pneg %p98
      // Predicated region
      $region9: #{tpu_custom_call.1} parent=5 // pred_check
        _
      $region10: #{tpu_custom_call.1} parent=5 // pred_check_branch
        %101 = sbr.rel (%p98) target = $region12
      $region11: #{tpu_custom_call.1} parent=5 // pred_region
        %s102 = ssub.s32 %s15, 1
        // Predicated region
        $region13: #{tpu_custom_call.1} parent=11 // pred_check
          %p103 = pneg %p62
        $region14: #{tpu_custom_call.1} parent=11 // pred_check_branch
          %105 = sbr.rel (%p103) target = $region16
        $region15: #{tpu_custom_call.1} parent=11 // pred_region
          %s107 = ssub.s32 512, 512
          %108 = vsyncadd [#allocation6], %s107
          %s109 = sshll.u32 [#allocation5], 4
          %s110 = int_to_ptr.vmem [resolvable:$true] %s109
          %115 = dma.hbm_to_vmem [thread:$0]  %s1, 512, %s110, [#allocation6], 128, 128, 8
        $region16: #{tpu_custom_call.1} parent=11 // pred_fallthru
          _
      $region12: #{tpu_custom_call.1} parent=5 // pred_fallthru
        _
      %p116 = scmp.lt.s32.totalorder %s15, 2
      // Predicated region
      $region17: #{tpu_custom_call.1} parent=5 // pred_check
        %p117 = pneg %p116
      $region18: #{tpu_custom_call.1} parent=5 // pred_check_branch
        %119 = sbr.rel (%p117) target = $region20
      $region19: #{tpu_custom_call.1} parent=5 // pred_region
        // Predicated region
        $region21: #{tpu_custom_call.1} parent=19 // pred_check
          %p120 = pneg %p35
        $region22: #{tpu_custom_call.1} parent=19 // pred_check_branch
          %122 = sbr.rel (%p120) target = $region24
        $region23: #{tpu_custom_call.1} parent=19 // pred_region
          %s123 = sand.u32 %s25, 1
          %s124 = scalar_lea.sflag [#allocation3], %s123
          %s125 = sand.u32 %s25, 1
          %s126 = smul.addr %s125, 8
          %s127 = scalar_lea.vmem [#allocation2], %s126
          %s129 = ssub.s32 128, 128
          %130 = vsyncadd %s124, %s129
          %s131 = smul.addr %s15, 128
          %s132 = scalar_lea.hbm %s0, %s131
          %s134 = sshll.u32 %s127, 4
          %s135 = int_to_ptr.vmem [resolvable:$true] %s134
          %137 = dma.hbm_to_vmem [thread:$0]  %s132, 128, %s135, %s124
        $region24: #{tpu_custom_call.1} parent=19 // pred_fallthru
          _
      $region20: #{tpu_custom_call.1} parent=5 // pred_fallthru
        _
      %p138 = scmp.le.s32.totalorder 1, %s15
      %p139 = scmp.lt.s32.totalorder %s15, 3
      %p140 = pnand %p138, %p139
      %p141 = pneg %p140
      // Predicated region
      $region25: #{tpu_custom_call.1} parent=5 // pred_check
        _
      $region26: #{tpu_custom_call.1} parent=5 // pred_check_branch
        %143 = sbr.rel (%p140) target = $region28
      $region27: #{tpu_custom_call.1} parent=5 // pred_region
        %s144 = ssub.s32 %s15, 1
        %s145 = sand.u32 %s28, 1
        %s146 = scalar_lea.sflag [#allocation3], %s145
        %s147 = sand.u32 %s28, 1
        %s148 = smul.addr %s147, 8
        %s149 = scalar_lea.vmem [#allocation2], %s148
        // Predicated region
        $region29: #{tpu_custom_call.1} parent=27 // pred_check
          %p150 = pneg %p41
        $region30: #{tpu_custom_call.1} parent=27 // pred_check_branch
          %152 = sbr.rel (%p150) target = $region32
        $region31: #{tpu_custom_call.1} parent=27 // pred_region
          %153 = dma.done %s146, 128
        $region32: #{tpu_custom_call.1} parent=27 // pred_fallthru
          _
        // Predicated region
        $region33: #{tpu_custom_call.1} parent=27 // pred_check
          %p154 = pneg %p62
        $region34: #{tpu_custom_call.1} parent=27 // pred_check_branch
          %156 = sbr.rel (%p154) target = $region36
        $region35: #{tpu_custom_call.1} parent=27 // pred_region
          %157 = dma.done [#allocation6], 512
        $region36: #{tpu_custom_call.1} parent=27 // pred_fallthru
          _
        %s158 = sand.u32 %s28, 1
        %s159 = scalar_lea.sflag [#allocation3], %s158
        %s160 = sand.u32 %s28, 1
        %s161 = smul.addr %s160, 8
        %s162 = scalar_lea.vmem [#allocation2], %s161
        %p163 = pneg %p41
        %p164 = pneg %p38
        %p165 = pneg %p62
        %p166 = pneg %p59
        %p167 = pneg %p88
        %p168 = pneg %p85
        %s169 = sand.u32 %s75, 1
        %s170 = scalar_lea.sflag [#allocation4], %s169
        %s171 = sand.u32 %s75, 1
        %s172 = smul.addr %s171, 8
        %s173 = scalar_lea.vmem [#allocation7], %s172
        %v174 = vld [vmem:[%s149] sm:$0xff]
        %v175 = vld [vmem:[#allocation5] sm:$0xff]
        %v176 = vld [vmem:[#allocation5 + $0x8] sm:$0xff]
        %v177 = vld [vmem:[#allocation5 + $0x10] sm:$0xff]
        %v178 = vld [vmem:[#allocation5 + $0x18] sm:$0xff]
        %vm179 = vcmask 261120
        %v181 = vsel %vm179, %v174, 0
        %183 = vmatprep.subr.mxu0 0.0
        %184 = vmatpush1.msra.mxu0 %v175
        %185 = vmatprep.subr.mxu0 0.0
        %186 = vmatpush1.msra.mxu0 %v176
        %187 = vmatprep.subr.mxu0 0.0
        %188 = vmatpush1.msra.mxu0 %v177
        %189 = vmatprep.subr.mxu0 0.0
        %190 = vmatpush1.msra.mxu0 %v178
        %191 = vmatprep.subr.mxu0 0.0
        %192 = vmatpush1.msra.mxu0 0.0
        %193 = vmatprep.subr.mxu0 0.0
        %194 = vmatpush1.msra.mxu0 0.0
        %195 = vmatprep.subr.mxu0 0.0
        %196 = vmatpush1.msra.mxu0 0.0
        %197 = vmatprep.subr.mxu0 0.0
        %198 = vmatpush1.msra.mxu0 0.0
        %199 = vmatprep.subr.mxu0 0.0
        %200 = vmatpush1.msra.mxu0 0.0
        %201 = vmatprep.subr.mxu0 0.0
        %202 = vmatpush1.msra.mxu0 0.0
        %203 = vmatprep.subr.mxu0 0.0
        %204 = vmatpush1.msra.mxu0 0.0
        %205 = vmatprep.subr.mxu0 0.0
        %206 = vmatpush1.msra.mxu0 0.0
        %207 = vmatprep.subr.mxu0 0.0
        %208 = vmatpush1.msra.mxu0 0.0
        %209 = vmatprep.subr.mxu0 0.0
        %210 = vmatpush1.msra.mxu0 0.0
        %211 = vmatprep.subr.mxu0 0.0
        %212 = vmatpush1.msra.mxu0 0.0
        %213 = vmatprep.subr.mxu0 0.0
        %214 = vmatpush1.msra.mxu0 0.0
        %215 = vmatprep.subr.mxu0 0.0
        %216 = vmatpush1.msra.mxu0 0.0
        %217 = vmatprep.subr.mxu0 0.0
        %218 = vmatpush1.msra.mxu0 0.0
        %219 = vmatprep.subr.mxu0 0.0
        %220 = vmatpush1.msra.mxu0 0.0
        %221 = vmatprep.subr.mxu0 0.0
        %222 = vmatpush1.msra.mxu0 0.0
        %223 = vmatprep.subr.mxu0 0.0
        %224 = vmatpush1.msra.mxu0 0.0
        %225 = vmatprep.subr.mxu0 0.0
        %226 = vmatpush1.msra.mxu0 0.0
        %227 = vmatprep.subr.mxu0 0.0
        %228 = vmatpush1.msra.mxu0 0.0
        %229 = vmatprep.subr.mxu0 0.0
        %230 = vmatpush1.msra.mxu0 0.0
        %231 = vmatprep.subr.mxu0 0.0
        %232 = vmatpush1.msra.mxu0 0.0
        %233 = vmatprep.subr.mxu0 0.0
        %234 = vmatpush1.msra.mxu0 0.0
        %235 = vmatprep.subr.mxu0 0.0
        %236 = vmatpush1.msra.mxu0 0.0
        %237 = vmatprep.subr.mxu0 0.0
        %238 = vmatpush1.msra.mxu0 0.0
        %239 = vmatprep.subr.mxu0 0.0
        %240 = vmatpush1.msra.mxu0 0.0
        %241 = vmatprep.subr.mxu0 0.0
        %242 = vmatpush1.msra.mxu0 0.0
        %243 = vmatprep.subr.mxu0 0.0
        %244 = vmatpush1.msra.mxu0 0.0
        %245 = vmatprep.subr.mxu0 0.0
        %246 = vmatpush1.msra.mxu0 0.0
        %247 = vmatprep.mubr.f32.mxu0 0.0
        %248 = vmatmul.mubr.f32.gmra.mrb[0].mxu0 %v181
        %v249 = vpop.f32.mrb[0].mxu0
        %v250 = vadd.f32 0.0, %v249
        %v251 = vpop.f32.mrb[0].mxu0
        %252 = vdwg.mxu0
        %v253 = vmul.f32 %v250, 0.17677669
        %255 = vrot.lane.b32.xlu0 %v250, 96
        %v256 = vpop.permute.xlu0 %255
        %v258 = vsel %vm179, %v253, 0
        %v260 = vsel %vm179, %v256, 0
        %262 = vmatprep.subr.mxu0 0.0
        %263 = vmatpush1.xpose.msra.mxu0 %v260
        %264 = vmatprep.subr.mxu0 0.0
        %265 = vmatpush1.xpose.msra.mxu0 0.0
        %266 = vmatprep.subr.mxu0 0.0
        %267 = vmatpush1.xpose.msra.mxu0 0.0
        %268 = vmatprep.subr.mxu0 0.0
        %269 = vmatpush1.xpose.msra.mxu0 0.0
        %270 = vmatprep.subr.mxu0 0.0
        %271 = vmatpush1.xpose.msra.mxu0 0.0
        %272 = vmatprep.subr.mxu0 0.0
        %273 = vmatpush1.xpose.msra.mxu0 0.0
        %274 = vmatprep.subr.mxu0 0.0
        %275 = vmatpush1.xpose.msra.mxu0 0.0
        %276 = vmatprep.subr.mxu0 0.0
        %277 = vmatpush1.xpose.msra.mxu0 0.0
        %278 = vmatprep.subr.mxu0 0.0
        %279 = vmatpush1.xpose.msra.mxu0 0.0
        %280 = vmatprep.subr.mxu0 0.0
        %281 = vmatpush1.xpose.msra.mxu0 0.0
        %282 = vmatprep.subr.mxu0 0.0
        %283 = vmatpush1.xpose.msra.mxu0 0.0
        %284 = vmatprep.subr.mxu0 0.0
        %285 = vmatpush1.xpose.msra.mxu0 0.0
        %286 = vmatprep.subr.mxu0 0.0
        %287 = vmatpush1.xpose.msra.mxu0 0.0
        %288 = vmatprep.subr.mxu0 0.0
        %289 = vmatpush1.xpose.msra.mxu0 0.0
        %290 = vmatprep.subr.mxu0 0.0
        %291 = vmatpush1.xpose.msra.mxu0 0.0
        %292 = vmatprep.subr.mxu0 0.0
        %293 = vmatpush1.xpose.msra.mxu0 0.0
        %294 = vmatprep.subr.mxu0 0.0
        %295 = vmatpush1.xpose.msra.mxu0 0.0
        %296 = vmatprep.subr.mxu0 0.0
        %297 = vmatpush1.xpose.msra.mxu0 0.0
        %298 = vmatprep.subr.mxu0 0.0
        %299 = vmatpush1.xpose.msra.mxu0 0.0
        %300 = vmatprep.subr.mxu0 0.0
        %301 = vmatpush1.xpose.msra.mxu0 0.0
        %302 = vmatprep.subr.mxu0 0.0
        %303 = vmatpush1.xpose.msra.mxu0 0.0
        %304 = vmatprep.subr.mxu0 0.0
        %305 = vmatpush1.xpose.msra.mxu0 0.0
        %306 = vmatprep.subr.mxu0 0.0
        %307 = vmatpush1.xpose.msra.mxu0 0.0
        %308 = vmatprep.subr.mxu0 0.0
        %309 = vmatpush1.xpose.msra.mxu0 0.0
        %310 = vmatprep.subr.mxu0 0.0
        %311 = vmatpush1.xpose.msra.mxu0 0.0
        %312 = vmatprep.subr.mxu0 0.0
        %313 = vmatpush1.xpose.msra.mxu0 0.0
        %314 = vmatprep.subr.mxu0 0.0
        %315 = vmatpush1.xpose.msra.mxu0 0.0
        %316 = vmatprep.subr.mxu0 0.0
        %317 = vmatpush1.xpose.msra.mxu0 0.0
        %318 = vmatprep.subr.mxu0 0.0
        %319 = vmatpush1.xpose.msra.mxu0 0.0
        %320 = vmatprep.subr.mxu0 0.0
        %321 = vmatpush1.xpose.msra.mxu0 0.0
        %322 = vmatprep.subr.mxu0 0.0
        %323 = vmatpush1.xpose.msra.mxu0 0.0
        %324 = vmatprep.subr.mxu0 0.0
        %325 = vmatpush1.xpose.msra.mxu0 0.0
        %326 = vmatprep.mubr.f32.mxu0 0.0
        %327 = vmatmul.mubr.f32.gmra.mrb[0].mxu0 %v258
        %v328 = vpop.f32.mrb[0].mxu0
        %v329 = vadd.f32 0.0, %v328
        %v330 = vpop.f32.mrb[0].mxu0
        %331 = vdwg.mxu0
        %vm332 = vcmask 64512
        %v333 = vsel %vm332, %v329, -inf
        %334 = vmax.xlane.f32.xlu0 %v333
        %v335 = vpop.xlane.xlu0 %334
        %v336 = vsub.f32 %v329, %v335
        %v337 = vmul.f32 %v336, 1.442695
        %v338 = vpow.pop %v337
        %v339 = vsel %vm332, %v338, 0.0
        %340 = vadd.xlane.f32.xlu0 %v339
        %v341 = vpop.xlane.xlu0 %340
        %342 = vrot.lane.b32.xlu0 %v250, 64
        %v343 = vpop.permute.xlu0 %342
        %v346 = vsel %vm332, %v338, 0
        %348 = vmatprep.subr.mxu0 0.0
        %349 = vmatpush1.msra.mxu0 %v343
        %350 = vmatprep.subr.mxu0 0.0
        %351 = vmatpush1.msra.mxu0 0.0
        %352 = vmatprep.subr.mxu0 0.0
        %353 = vmatpush1.msra.mxu0 0.0
        %354 = vmatprep.subr.mxu0 0.0
        %355 = vmatpush1.msra.mxu0 0.0
        %356 = vmatprep.subr.mxu0 0.0
        %357 = vmatpush1.msra.mxu0 0.0
        %358 = vmatprep.subr.mxu0 0.0
        %359 = vmatpush1.msra.mxu0 0.0
        %360 = vmatprep.subr.mxu0 0.0
        %361 = vmatpush1.msra.mxu0 0.0
        %362 = vmatprep.subr.mxu0 0.0
        %363 = vmatpush1.msra.mxu0 0.0
        %364 = vmatprep.subr.mxu0 0.0
        %365 = vmatpush1.msra.mxu0 0.0
        %366 = vmatprep.subr.mxu0 0.0
        %367 = vmatpush1.msra.mxu0 0.0
        %368 = vmatprep.subr.mxu0 0.0
        %369 = vmatpush1.msra.mxu0 0.0
        %370 = vmatprep.subr.mxu0 0.0
        %371 = vmatpush1.msra.mxu0 0.0
        %372 = vmatprep.subr.mxu0 0.0
        %373 = vmatpush1.msra.mxu0 0.0
        %374 = vmatprep.subr.mxu0 0.0
        %375 = vmatpush1.msra.mxu0 0.0
        %376 = vmatprep.subr.mxu0 0.0
        %377 = vmatpush1.msra.mxu0 0.0
        %378 = vmatprep.subr.mxu0 0.0
        %379 = vmatpush1.msra.mxu0 0.0
        %380 = vmatprep.subr.mxu0 0.0
        %381 = vmatpush1.msra.mxu0 0.0
        %382 = vmatprep.subr.mxu0 0.0
        %383 = vmatpush1.msra.mxu0 0.0
        %384 = vmatprep.subr.mxu0 0.0
        %385 = vmatpush1.msra.mxu0 0.0
        %386 = vmatprep.subr.mxu0 0.0
        %387 = vmatpush1.msra.mxu0 0.0
        %388 = vmatprep.subr.mxu0 0.0
        %389 = vmatpush1.msra.mxu0 0.0
        %390 = vmatprep.subr.mxu0 0.0
        %391 = vmatpush1.msra.mxu0 0.0
        %392 = vmatprep.subr.mxu0 0.0
        %393 = vmatpush1.msra.mxu0 0.0
        %394 = vmatprep.subr.mxu0 0.0
        %395 = vmatpush1.msra.mxu0 0.0
        %396 = vmatprep.subr.mxu0 0.0
        %397 = vmatpush1.msra.mxu0 0.0
        %398 = vmatprep.subr.mxu0 0.0
        %399 = vmatpush1.msra.mxu0 0.0
        %400 = vmatprep.subr.mxu0 0.0
        %401 = vmatpush1.msra.mxu0 0.0
        %402 = vmatprep.subr.mxu0 0.0
        %403 = vmatpush1.msra.mxu0 0.0
        %404 = vmatprep.subr.mxu0 0.0
        %405 = vmatpush1.msra.mxu0 0.0
        %406 = vmatprep.subr.mxu0 0.0
        %407 = vmatpush1.msra.mxu0 0.0
        %408 = vmatprep.subr.mxu0 0.0
        %409 = vmatpush1.msra.mxu0 0.0
        %410 = vmatprep.subr.mxu0 0.0
        %411 = vmatpush1.msra.mxu0 0.0
        %412 = vmatprep.mubr.f32.mxu0 0.0
        %413 = vmatmul.mubr.f32.gmra.mrb[0].mxu0 %v346
        %v414 = vpop.f32.mrb[0].mxu0
        %v415 = vadd.f32 0.0, %v414
        %v416 = vpop.f32.mrb[0].mxu0
        %417 = vdwg.mxu0
        %v418 = vrcp.pop %v341
        %v419 = vmul.f32 %v341, %v418
        %v420 = vsub.f32 2.0, %v419
        %v421 = vmul.f32 %v418, %v420
        %v422 = vmul.f32 %v415, %v421
        %423 = vst.msk [vmem:[%s173] sm:$0xff] %vm179, %v422
        %s424 = sand.u32 %s75, 1
        %s425 = scalar_lea.sflag [#allocation4], %s424
        %s426 = sand.u32 %s75, 1
        %s427 = smul.addr %s426, 8
        %s428 = scalar_lea.vmem [#allocation7], %s427
        // Predicated region
        $region37: #{tpu_custom_call.1} parent=27 // pred_check
          %p429 = pneg %p85
        $region38: #{tpu_custom_call.1} parent=27 // pred_check_branch
          %431 = sbr.rel (%p429) target = $region40
        $region39: #{tpu_custom_call.1} parent=27 // pred_region
          %s433 = ssub.s32 128, 128
          %434 = vsyncadd %s425, %s433
          %s435 = smul.addr %s20, 128
          %s436 = scalar_lea.hbm %s2, %s435
          %s438 = sshll.u32 %s428, 4
          %s439 = int_to_ptr.vmem [resolvable:$true] %s438
          %441 = dma.vmem_to_hbm [thread:$0]  %s439, 128, %s436, %s425
        $region40: #{tpu_custom_call.1} parent=27 // pred_fallthru
          _
      $region28: #{tpu_custom_call.1} parent=5 // pred_fallthru
        _
      %p442 = scmp.le.s32.totalorder 2, %s15
      // Predicated region
      $region41: #{tpu_custom_call.1} parent=5 // pred_check
        %p443 = pneg %p442
      $region42: #{tpu_custom_call.1} parent=5 // pred_check_branch
        %445 = sbr.rel (%p443) target = $region44
      $region43: #{tpu_custom_call.1} parent=5 // pred_region
        %s446 = ssub.s32 %s15, 2
        // Predicated region
        $region45: #{tpu_custom_call.1} parent=43 // pred_check
          %p447 = pneg %p91
        $region46: #{tpu_custom_call.1} parent=43 // pred_check_branch
          %449 = sbr.rel (%p447) target = $region48
        $region47: #{tpu_custom_call.1} parent=43 // pred_region
          %s450 = sand.u32 %s76, 1
          %s451 = scalar_lea.sflag [#allocation4], %s450
          %s452 = sand.u32 %s76, 1
          %s453 = smul.addr %s452, 8
          %s454 = scalar_lea.vmem [#allocation7], %s453
          %455 = dma.done %s451, 128
        $region48: #{tpu_custom_call.1} parent=43 // pred_fallthru
          _
      $region44: #{tpu_custom_call.1} parent=5 // pred_fallthru
        _
    $region6: #{tpu_custom_call.1} parent=1 // loop_footer
      %s19 = sadd.s32 1, %s15
    $region7: #{tpu_custom_call.1} parent=1 // loop_footer_branch
      %14 = sbr.rel target = $region3
    $region8: #{tpu_custom_call.1} parent=1 // loop_exit
      _
    %456 = vsyncpa [#allocation3], 1
    %s457 = scalar_lea.sflag [#allocation3], 1
    %458 = vsyncpa %s457, 1
    %459 = vsyncpa [#allocation6], 1
    %460 = vsyncpa [#allocation4], 1
    %s461 = scalar_lea.sflag [#allocation4], 1
    %462 = vsyncpa %s461, 1

</llo_original>
